<compile_context>
chip_gen: v5e
topology: v5e:2x2
jax: 0.10.0
libtpu: 0.0.40
codegen_flags: <defaults>
</compile_context>

<pallas_src>
import functools

import jax
import jax.numpy as jnp
from jax.experimental import pallas as pl
from jax.experimental.pallas import tpu as pltpu


def _pick_tile(n, cap=4096):
    """Largest multiple-of-128 divisor of n (capped); else the whole axis."""
    best = None
    t = 128
    while t <= min(n, cap):
        if n % t == 0:
            best = t
        t += 128
    return best if best is not None else n


# -----------------------------------------------------------------------------
# Kernel 1: fused 1x1 conv (BN scale folded into weights) + shift + SiLU.
#   x block : (1, C1, T)  -- spatial positions on lanes (lane-dense)
#   y block : (1, C2, T)  -- lane-dense stores (T is a multiple of 128 or full)
#   psum    : (8, 128) tile holding this step's activation sum (spread evenly)
# -----------------------------------------------------------------------------
def _conv_bn_silu_kernel(x_ref, w_ref, shift_ref, o_ref, psum_ref):
    x = x_ref[0]                          # (C1, T)
    w = w_ref[...]                        # (C2, C1), BN scale already folded in
    c1 = w.shape[1]
    if c1 <= 16:
        # K is tiny: do the contraction as C1 broadcast FMAs on the VPU
        # instead of wasting the MXU on a K=4 matmul.
        acc = w[:, 0:1] * x[0:1, :]
        for c in range(1, c1):
            acc = acc + w[:, c:c + 1] * x[c:c + 1, :]
    else:
        acc = jnp.dot(w, x, preferred_element_type=jnp.float32)
    y = acc + shift_ref[...]              # folded BatchNorm shift, (C2,1) bcast
    y = y * jax.nn.sigmoid(y)             # SiLU
    o_ref[0] = y
    # Partial sum for the dynamic-lambda global mean: spread the tile's sum
    # over a full (8,128) tile so the store stays layout-aligned; host sums it.
    psum_ref[...] = jnp.full((8, 128), 1.0 / 1024.0, jnp.float32) * jnp.sum(y)


def conv_bn_silu(x3, w_scaled, shift, *, tile_cap=4096):
    B, C1, HW = x3.shape
    C2 = w_scaled.shape[0]
    T = _pick_tile(HW, tile_cap)
    nt = HW // T
    return pl.pallas_call(
        _conv_bn_silu_kernel,
        out_shape=(
            jax.ShapeDtypeStruct((B, C2, HW), jnp.float32),
            jax.ShapeDtypeStruct((B * nt * 8, 128), jnp.float32),
        ),
        grid=(B, nt),
        in_specs=[
            pl.BlockSpec((1, C1, T), lambda b, t: (b, 0, t)),
            pl.BlockSpec((C2, C1), lambda b, t: (0, 0)),
            pl.BlockSpec((C2, 1), lambda b, t: (0, 0)),
        ],
        out_specs=(
            pl.BlockSpec((1, C2, T), lambda b, t: (b, 0, t)),
            pl.BlockSpec((8, 128), lambda b, t: (b * nt + t, 0)),
        ),
        compiler_params=pltpu.CompilerParams(
            dimension_semantics=("parallel", "parallel")),
    )(x3, w_scaled, shift)


# -----------------------------------------------------------------------------
# Kernel 2: DynamicSimAM over the 4x4 spatial slicing + per-block SEBlock.
#   x block : (1, C2, Hp*Wp)  lane-dense slab for one batch element
#   sel     : (Hp*Wp, 16) one-hot block membership; selt = sel.T
#   lam     : (1,) dynamic lambda scalar in SMEM
# -----------------------------------------------------------------------------
def _simam_se_kernel(lam_ref, x_ref, sel_ref, selt_ref, w1_ref, w2_ref, o_ref,
                     *, inv_p, inv_n):
    x = x_ref[0]                          # (C2, HW), lane-dense
    sel = sel_ref[...]                    # (HW, 16)
    selt = selt_ref[...]                  # (16, HW)
    lam = lam_ref[0]                      # scalar from SMEM

    # Segmented (per 4x4-slice block) sums via one-hot matmuls: keeps the data
    # in its lane-dense layout; no masks, no in-kernel reshapes.
    bsum = jnp.dot(x, sel, preferred_element_type=jnp.float32)       # (C2, 16)
    bsq = jnp.dot(x * x, sel, preferred_element_type=jnp.float32)    # (C2, 16)
    mu = bsum * inv_p
    s = bsq - bsum * mu                   # single-pass sum((x - mu)^2) / block
    dinv = 0.25 * pl.reciprocal(s * inv_n + lam, approx=False)

    # Broadcast per-block stats back to element positions (one-hot matmul).
    mu_f = jnp.dot(mu, selt, preferred_element_type=jnp.float32)     # (C2, HW)
    dinv_f = jnp.dot(dinv, selt, preferred_element_type=jnp.float32)
    d = x - mu_f
    e = x * jax.nn.sigmoid(d * d * dinv_f + 0.5)                     # SimAM

    # SEBlock applied per block: pool over block positions, fc1-ReLU-fc2-sigmoid.
    # (hidden = C2//16 is tiny; these dots are negligible at this size.)
    pooled = jnp.dot(e, sel, preferred_element_type=jnp.float32) * inv_p  # (C2,16)
    h = jnp.maximum(
        jnp.dot(w1_ref[...], pooled, preferred_element_type=jnp.float32), 0.0)
    se = jax.nn.sigmoid(
        jnp.dot(w2_ref[...], h, preferred_element_type=jnp.float32))      # (C2,16)
    se_f = jnp.dot(se, selt, preferred_element_type=jnp.float32)          # (C2,HW)
    o_ref[0] = e * se_f


def simam_se(yp, lam, sel, selt, w1, w2):
    B, C2, HW = yp.shape
    hid = w1.shape[0]
    P = HW // 16
    kernel = functools.partial(
        _simam_se_kernel, inv_p=1.0 / P, inv_n=1.0 / max(P - 1, 1))
    return pl.pallas_call(
        kernel,
        out_shape=jax.ShapeDtypeStruct((B, C2, HW), jnp.float32),
        grid=(B,),
        in_specs=[
            pl.BlockSpec(memory_space=pltpu.MemorySpace.SMEM),        # lam (1,)
            pl.BlockSpec((1, C2, HW), lambda b: (b, 0, 0)),
            pl.BlockSpec((HW, 16), lambda b: (0, 0)),
            pl.BlockSpec((16, HW), lambda b: (0, 0)),
            pl.BlockSpec((hid, C2), lambda b: (0, 0)),
            pl.BlockSpec((C2, hid), lambda b: (0, 0)),
        ],
        out_specs=pl.BlockSpec((1, C2, HW), lambda b: (b, 0, 0)),
        compiler_params=pltpu.CompilerParams(
            dimension_semantics=("parallel",),
            # keep the per-step footprint well inside v7x's 64 MiB VMEM
            vmem_limit_bytes=32 * 1024 * 1024),
    )(lam, yp, sel, selt, w1, w2)


# -----------------------------------------------------------------------------
# Full DSWSConv forward (NCHW in, NCHW out).  Only free reshapes in the glue.
# -----------------------------------------------------------------------------
def dswsconv_forward(x, params, *, e_lambda=1e-4):
    w_conv, bn_scale, bn_shift, w1, w2 = params       # w_conv: (C2, C1)
    B, C1, H, W = x.shape
    C2 = w_conv.shape[0]

    # Fold the BN scale into the conv weight on the host (one less VPU multiply
    # and one less input stream in kernel 1).
    w_scaled = (w_conv * bn_scale[:, None]).astype(jnp.float32)
    shift = bn_shift.reshape(C2, 1).astype(jnp.float32)

    # ---- conv1x1 + BN + SiLU (Pallas kernel 1); layout (B, C, H*W), no transposes
    x3 = x.reshape(B, C1, H * W)
    y3, psum = conv_bn_silu(x3, w_scaled, shift)

    # ---- pad H, W to multiples of 4 with zeros (as the attention module does)
    pad_h = (4 - H % 4) % 4
    pad_w = (4 - W % 4) % 4
    Hp, Wp = H + pad_h, W + pad_w
    if pad_h or pad_w:
        yp = jnp.pad(y3.reshape(B, C2, H, W),
                     ((0, 0), (0, 0), (0, pad_h), (0, pad_w)))
        yp = yp.reshape(B, C2, Hp * Wp)
    else:
        yp = y3

    # ---- dynamic lambda from the global mean of the (padded) activation.
    # psum already carries the total activation sum; zero padding adds nothing.
    gm = jnp.sum(psum) / (B * C2 * Hp * Wp)
    lam = (e_lambda * jnp.log1p(jnp.abs(gm))).astype(jnp.float32).reshape(1)

    # ---- one-hot block-membership matrix for the 4x4 slicing (tiny, constant)
    bh, bw = Hp // 4, Wp // 4
    blk_id = (jnp.arange(Hp) // bh)[:, None] * 4 + (jnp.arange(Wp) // bw)[None, :]
    sel = jax.nn.one_hot(blk_id.reshape(-1), 16, dtype=jnp.float32)   # (Hp*Wp,16)

    # ---- SimAM (per 4x4-slice block) + per-block SE (Pallas kernel 2)
    ob = simam_se(yp, lam, sel, sel.T, w1, w2)

    out = ob.reshape(B, C2, Hp, Wp)
    if pad_h or pad_w:
        out = out[:, :, :H, :W]
    return out


# -----------------------------------------------------------------------------
# Pure-JAX reference (mirrors the PyTorch forward, block loop and all)
# -----------------------------------------------------------------------------
def reference_forward(x, params, *, e_lambda=1e-4):
    w_conv, bn_scale, bn_shift, w1, w2 = params
    B, C1, H, W = x.shape
    y = jnp.einsum("bchw,dc->bdhw", x, w_conv)
    y = y * bn_scale[None, :, None, None] + bn_shift[None, :, None, None]
    y = y * jax.nn.sigmoid(y)

    pad_h = (4 - H % 4) % 4
    pad_w = (4 - W % 4) % 4
    if pad_h or pad_w:
        y = jnp.pad(y, ((0, 0), (0, 0), (0, pad_h), (0, pad_w)))
    Hp, Wp = y.shape[2], y.shape[3]
    bh, bw = Hp // 4, Wp // 4
    gm = jnp.mean(y)
    lam = e_lambda * jnp.log1p(jnp.abs(gm))
    n = bh * bw - 1

    rows = []
    for i in range(4):
        cols = []
        for j in range(4):
            blk = y[:, :, i * bh:(i + 1) * bh, j * bw:(j + 1) * bw]
            mu = blk.mean(axis=(2, 3), keepdims=True)
            d = (blk - mu) ** 2
            s = d.sum(axis=(2, 3), keepdims=True)
            yy = d / (4.0 * (s / n + lam)) + 0.5
            e = blk * jax.nn.sigmoid(yy)
            pooled = e.mean(axis=(2, 3))
            h = jnp.maximum(pooled @ w1.T, 0.0)
            se = jax.nn.sigmoid(h @ w2.T)
            cols.append(e * se[:, :, None, None])
        rows.append(jnp.concatenate(cols, axis=3))
    out = jnp.concatenate(rows, axis=2)
    return out[:, :, :H, :W]


# -----------------------------------------------------------------------------
if __name__ == "__main__":
    # DSWSConv(c1=4, c2=32, k=1): SE reduction=16 -> hidden = 32 // 16 = 2
    B, C1, C2, H, W = 2, 4, 32, 16, 16
    HIDDEN = C2 // 16
    key = jax.random.PRNGKey(0)
    kx, kw, kg, kb, km, kv, k1, k2 = jax.random.split(key, 8)

    x = jax.random.normal(kx, (B, C1, H, W), dtype=jnp.float32)

    # Conv2d(c1, c2, 1, bias=False): weight (C2, C1, 1, 1) -> stored as (C2, C1)
    w_conv = 0.2 * jax.random.normal(kw, (C2, C1), dtype=jnp.float32)

    # BatchNorm2d(C2), inference-mode params folded into scale/shift
    gamma = 1.0 + 0.1 * jax.random.normal(kg, (C2,), dtype=jnp.float32)
    beta = 0.05 * jax.random.normal(kb, (C2,), dtype=jnp.float32)
    run_mean = 0.1 * jax.random.normal(km, (C2,), dtype=jnp.float32)
    run_var = jnp.abs(jax.random.normal(kv, (C2,), dtype=jnp.float32)) + 0.5
    eps = 1e-5
    bn_scale = gamma / jnp.sqrt(run_var + eps)
    bn_shift = beta - run_mean * bn_scale

    # SEBlock fc weights (bias=False): W1 (hidden, C2), W2 (C2, hidden)
    w1 = 0.3 * jax.random.normal(k1, (HIDDEN, C2), dtype=jnp.float32)
    w2 = 0.3 * jax.random.normal(k2, (C2, HIDDEN), dtype=jnp.float32)

    params = (w_conv, bn_scale, bn_shift, w1, w2)

    out = jax.block_until_ready(dswsconv_forward(x, params))
    ref = jax.block_until_ready(reference_forward(x, params))

    assert out.shape == (B, C2, H, W), out.shape
    assert jnp.allclose(out, ref, rtol=1e-4, atol=2e-5), (
        float(jnp.max(jnp.abs(out - ref))))
    print("KERNEL_OK")
</pallas_src>

<mosaic_0001>
module attributes {stable_mosaic.version = 11 : i64} {
  func.func @_conv_bn_silu_kernel(%arg0: i32, %arg1: i32, %arg2: memref<1x4x256xf32, #tpu.memory_space<vmem>>, %arg3: memref<32x4xf32, #tpu.memory_space<vmem>>, %arg4: memref<32x1xf32, #tpu.memory_space<vmem>>, %arg5: memref<1x32x256xf32, #tpu.memory_space<vmem>>, %arg6: memref<8x128xf32, #tpu.memory_space<vmem>>) attributes {dimension_semantics = [#tpu.dimension_semantics<parallel>, #tpu.dimension_semantics<parallel>], iteration_bounds = array<i64: 2, 1>, scalar_prefetch = 0 : i64, scratch_operands = 0 : i64, tpu.core_type = #tpu.core_type<tc>, window_params = [{transform_indices = @transform_0, window_bounds = array<i64: 1, 4, 256>}, {pipeline_mode = #tpu.pipeline_mode<synchronous>, transform_indices = @transform_1, window_bounds = array<i64: 32, 4>}, {pipeline_mode = #tpu.pipeline_mode<synchronous>, transform_indices = @transform_2, window_bounds = array<i64: 32, 1>}, {transform_indices = @transform_3, window_bounds = array<i64: 1, 32, 256>}, {transform_indices = @transform_4, window_bounds = array<i64: 8, 128>}]} {
    %c0 = arith.constant 0 : index
    %c0_0 = arith.constant 0 : index
    %c0_1 = arith.constant 0 : index
    %0 = vector.load %arg2[%c0, %c0_0, %c0_1] : memref<1x4x256xf32, #tpu.memory_space<vmem>>, vector<1x4x256xf32>
    %1 = vector.shape_cast %0 : vector<1x4x256xf32> to vector<4x256xf32>
    %c0_2 = arith.constant 0 : index
    %c0_3 = arith.constant 0 : index
    %2 = vector.load %arg3[%c0_2, %c0_3] : memref<32x4xf32, #tpu.memory_space<vmem>>, vector<32x4xf32>
    %3 = vector.extract_strided_slice %2 {offsets = [0, 0], sizes = [32, 1], strides = [1, 1]} : vector<32x4xf32> to vector<32x1xf32>
    %4 = vector.extract_strided_slice %1 {offsets = [0, 0], sizes = [1, 256], strides = [1, 1]} : vector<4x256xf32> to vector<1x256xf32>
    %5 = vector.broadcast %3 : vector<32x1xf32> to vector<32x256xf32>
    %6 = vector.broadcast %4 : vector<1x256xf32> to vector<32x256xf32>
    %7 = arith.mulf %5, %6 : vector<32x256xf32>
    %8 = vector.extract_strided_slice %2 {offsets = [0, 1], sizes = [32, 1], strides = [1, 1]} : vector<32x4xf32> to vector<32x1xf32>
    %9 = vector.extract_strided_slice %1 {offsets = [1, 0], sizes = [1, 256], strides = [1, 1]} : vector<4x256xf32> to vector<1x256xf32>
    %10 = vector.broadcast %8 : vector<32x1xf32> to vector<32x256xf32>
    %11 = vector.broadcast %9 : vector<1x256xf32> to vector<32x256xf32>
    %12 = arith.mulf %10, %11 : vector<32x256xf32>
    %13 = arith.addf %7, %12 : vector<32x256xf32>
    %14 = vector.extract_strided_slice %2 {offsets = [0, 2], sizes = [32, 1], strides = [1, 1]} : vector<32x4xf32> to vector<32x1xf32>
    %15 = vector.extract_strided_slice %1 {offsets = [2, 0], sizes = [1, 256], strides = [1, 1]} : vector<4x256xf32> to vector<1x256xf32>
    %16 = vector.broadcast %14 : vector<32x1xf32> to vector<32x256xf32>
    %17 = vector.broadcast %15 : vector<1x256xf32> to vector<32x256xf32>
    %18 = arith.mulf %16, %17 : vector<32x256xf32>
    %19 = arith.addf %13, %18 : vector<32x256xf32>
    %20 = vector.extract_strided_slice %2 {offsets = [0, 3], sizes = [32, 1], strides = [1, 1]} : vector<32x4xf32> to vector<32x1xf32>
    %21 = vector.extract_strided_slice %1 {offsets = [3, 0], sizes = [1, 256], strides = [1, 1]} : vector<4x256xf32> to vector<1x256xf32>
    %22 = vector.broadcast %20 : vector<32x1xf32> to vector<32x256xf32>
    %23 = vector.broadcast %21 : vector<1x256xf32> to vector<32x256xf32>
    %24 = arith.mulf %22, %23 : vector<32x256xf32>
    %25 = arith.addf %19, %24 : vector<32x256xf32>
    %c0_4 = arith.constant 0 : index
    %c0_5 = arith.constant 0 : index
    %26 = vector.load %arg4[%c0_4, %c0_5] : memref<32x1xf32, #tpu.memory_space<vmem>>, vector<32x1xf32>
    %27 = vector.broadcast %26 : vector<32x1xf32> to vector<32x256xf32>
    %28 = arith.addf %25, %27 : vector<32x256xf32>
    %29 = arith.negf %28 : vector<32x256xf32>
    %30 = math.exp %29 : vector<32x256xf32>
    %cst = arith.constant 1.000000e+00 : f32
    %31 = vector.broadcast %cst : f32 to vector<32x256xf32>
    %32 = arith.addf %31, %30 : vector<32x256xf32>
    %33 = arith.divf %31, %32 : vector<32x256xf32>
    %34 = arith.mulf %28, %33 : vector<32x256xf32>
    %c0_6 = arith.constant 0 : index
    %c0_7 = arith.constant 0 : index
    %c0_8 = arith.constant 0 : index
    %35 = vector.load %arg5[%c0_6, %c0_7, %c0_8] : memref<1x32x256xf32, #tpu.memory_space<vmem>>, vector<1x32x256xf32>
    %36 = vector.shape_cast %35 : vector<1x32x256xf32> to vector<32x256xf32>
    %37 = vector.shape_cast %34 : vector<32x256xf32> to vector<1x32x256xf32>
    tpu.vector_store %arg5[%c0_6, %c0_7, %c0_8], %37 {strides = array<i32>} : memref<1x32x256xf32, #tpu.memory_space<vmem>>, vector<1x32x256xf32>,
    %cst_9 = arith.constant 9.765625E-4 : f32
    %38 = vector.broadcast %cst_9 : f32 to vector<8x128xf32>
    %39 = vector.shape_cast %34 : vector<32x256xf32> to vector<1x32x256xf32>
    %cst_10 = arith.constant dense<0.000000e+00> : vector<1xf32>
    %40 = vector.multi_reduction <add>, %39, %cst_10 [1, 2] : vector<1x32x256xf32> to vector<1xf32>
    %41 = vector.shape_cast %40 : vector<1xf32> to vector<1x1x1xf32>
    %42 = vector.extract %41[0, 0, 0] : f32 from vector<1x1x1xf32>
    %43 = vector.broadcast %42 : f32 to vector<8x128xf32>
    %44 = arith.mulf %38, %43 : vector<8x128xf32>
    %c0_11 = arith.constant 0 : index
    %c0_12 = arith.constant 0 : index
    %45 = vector.load %arg6[%c0_11, %c0_12] : memref<8x128xf32, #tpu.memory_space<vmem>>, vector<8x128xf32>
    tpu.vector_store %arg6[%c0_11, %c0_12], %44 {strides = array<i32>} : memref<8x128xf32, #tpu.memory_space<vmem>>, vector<8x128xf32>,
    return
  }
  func.func @transform_0(%arg0: i32, %arg1: i32) -> (i32, i32, i32) {
    %c0_i32 = arith.constant 0 : i32
    %c0_i32_0 = arith.constant 0 : i32
    return %arg0, %c0_i32, %arg1 : i32, i32, i32
  }
  func.func @transform_1(%arg0: i32, %arg1: i32) -> (i32, i32) {
    %c0_i32 = arith.constant 0 : i32
    %c0_i32_0 = arith.constant 0 : i32
    %c0_i32_1 = arith.constant 0 : i32
    return %c0_i32, %c0_i32_0 : i32, i32
  }
  func.func @transform_2(%arg0: i32, %arg1: i32) -> (i32, i32) {
    %c0_i32 = arith.constant 0 : i32
    %c0_i32_0 = arith.constant 0 : i32
    %c0_i32_1 = arith.constant 0 : i32
    return %c0_i32, %c0_i32_0 : i32, i32
  }
  func.func @transform_3(%arg0: i32, %arg1: i32) -> (i32, i32, i32) {
    %c0_i32 = arith.constant 0 : i32
    %c0_i32_0 = arith.constant 0 : i32
    return %arg0, %c0_i32, %arg1 : i32, i32, i32
  }
  func.func @transform_4(%arg0: i32, %arg1: i32) -> (i32, i32) {
    %c1_i32 = arith.constant 1 : i32
    %0 = arith.muli %arg0, %c1_i32 : i32
    %1 = arith.addi %0, %arg1 : i32
    %c0_i32 = arith.constant 0 : i32
    %c0_i32_0 = arith.constant 0 : i32
    return %1, %c0_i32 : i32, i32
  }
}

</mosaic_0001>

<llo_original>
// kernel: tpu_custom_call.1
$region0: #{tpu_custom_call.1}
  #allocation0 [shape = 'u32[]', space=smem, size = 0x4, offset = 0x4, fixed_abs, tag = 'smem constant byte address 0x4 - core index']
  #allocation1 [shape = 'u32[72,128]{1,0:T(1,128)}', space=vmem, size = 0x9000, scoped, tag = 'internal scratch']
  %s0 = inlined_call_operand.vmem [shape: f32[2,4,256], index: 0, kind: input, shape index: {}]
  %s1 = inlined_call_operand.vmem [shape: f32[32,4], index: 1, kind: input, shape index: {}]
  %s2 = inlined_call_operand.vmem [shape: f32[32,1], index: 2, kind: input, shape index: {}]
  %s3 = inlined_call_operand.hbm [shape: f32[2,32,256], index: 3, kind: output, shape index: {0}]
  %s4 = inlined_call_operand.hbm [shape: f32[16,128], index: 4, kind: output, shape index: {1}]
  %5 = xla_tuple %s3, %s4
  %s6 = sld [smem:[#allocation0]]
  $region53: #{tpu_custom_call.1} parent=0
    _
  %s8 = ssub.s32 1, %s6
  %s9 = scalar_select 0, %s8, %s6
  $region1: #{tpu_custom_call.1} parent=0
    #allocation2 [shape = 'u8[65536]{0}', space=vmem, size = 0x10000, scoped, tag = 'output window, operand 0']
    #allocation3 [shape = 's32[2]{0}', space=sflag, size = 0x8, scoped, tag = 'scoped memory for tpu_custom_call.1']
    #allocation4 [shape = 'u8[8192]{0}', space=vmem, size = 0x2000, scoped, tag = 'output window, operand 1']
    #allocation5 [shape = 's32[2]{0}', space=sflag, size = 0x8, scoped, tag = 'scoped memory for tpu_custom_call.1']
    %10 = vsyncpa [#allocation3], 0
    %s11 = scalar_lea.sflag [#allocation3], 1
    %12 = vsyncpa %s11, 0
    %13 = vsyncpa [#allocation5], 0
    %s14 = scalar_lea.sflag [#allocation5], 1
    %15 = vsyncpa %s14, 0
    loop: start=0, step=1, limit=4
    $region2: #{tpu_custom_call.1} parent=1 // loop_pre_header
      _
    $region3: #{tpu_custom_call.1} parent=1 // loop_header
      %s17 = sphi 0, %s21
      %p18 = scmp.ge.s32.totalorder %s17, 4
      %s24 = sphi 0, %s36
      %s25 = sphi 0, %s32
      %s26 = sphi 0, %s24
      %s27 = sphi 0, %s25
      %s28 = sphi 0, %s26
      %s29 = sphi 0, %s27
      %s41 = sphi 0, %s43
      %s44 = sphi 0, %s41
      %s45 = sphi 0, %s44
      %s61 = sphi 0, %s45
      %s65 = sphi 0, %s65
      %s67 = sphi 0, %s65
      %s68 = sphi 0, %s67
      %s82 = sphi 0, %s68
      %s86 = sphi 0, %s86
      %s88 = sphi 0, %s86
      %s89 = sphi 0, %s88
      %s103 = sphi 0, %s89
      %s111 = sphi 0, %s113
      %s114 = sphi 0, %s111
      %s115 = sphi 0, %s114
      %s131 = sphi 0, %s115
      %s139 = sphi 0, %s141
      %s142 = sphi 0, %s139
      %s143 = sphi 0, %s142
      %s159 = sphi 0, %s143
    $region4: #{tpu_custom_call.1} parent=1 // loop_header_branch
      %20 = sbr.rel (%p18) target = $region8
    $region5: #{tpu_custom_call.1} parent=1 // loop_body
      %s22 = ssub.s32 %s17, 1
      %s23 = ssub.s32 %s17, 2
      %s30 = sadd.s32 1, %s25
      %p31 = scmp.ge.s32.totalorder %s30, 1
      %s32 = scalar_select %p31, 0, %s30
      %s33 = sadd.s32 1, %s24
      %s34 = scalar_select %p31, %s33, %s24
      %p35 = scmp.ge.s32.totalorder %s34, 2
      %s36 = scalar_select %p35, 0, %s34
      %s37 = ssub.s32 %s24, %s36
      %s38 = ssub.s32 %s25, %s32
      %s39 = sor.u32 %s37, %s38
      %p40 = scmp.eq.s32.totalorder %s39, 0
      %s42 = sadd.s32 %s41, 1
      %s43 = scalar_select %p40, %s41, %s42
      %p46 = pneg %p40
      %p47 = scmp.eq.s32.totalorder %s17, 1
      %p48 = por %p46, %p47
      %p49 = scmp.ne.s32.totalorder %s41, %s44
      %p50 = scmp.eq.s32.totalorder %s17, 0
      %p51 = por %p49, %p50
      %p52 = scmp.ne.s32.totalorder %s41, %s44
      %p53 = scmp.eq.s32.totalorder %s22, 1
      %p54 = por %p52, %p53
      %p55 = scmp.ne.s32.totalorder %s44, %s45
      %p56 = scmp.eq.s32.totalorder %s22, 0
      %p57 = por %p55, %p56
      %p58 = scmp.ne.s32.totalorder %s44, %s45
      %p59 = scmp.eq.s32.totalorder %s23, 1
      %p60 = por %p58, %p59
      %p62 = scmp.ne.s32.totalorder %s45, %s61
      %p63 = scmp.eq.s32.totalorder %s23, 0
      %p64 = por %p62, %p63
      %s66 = sadd.s32 %s65, 1
      %p69 = scmp.eq.s32.totalorder %s17, 1
      %p70 = scmp.ne.s32.totalorder %s65, %s67
      %p71 = scmp.eq.s32.totalorder %s17, 0
      %p72 = por %p70, %p71
      %p73 = scmp.ne.s32.totalorder %s65, %s67
      %p74 = scmp.eq.s32.totalorder %s22, 1
      %p75 = por %p73, %p74
      %p76 = scmp.ne.s32.totalorder %s67, %s68
      %p77 = scmp.eq.s32.totalorder %s22, 0
      %p78 = por %p76, %p77
      %p79 = scmp.ne.s32.totalorder %s67, %s68
      %p80 = scmp.eq.s32.totalorder %s23, 1
      %p81 = por %p79, %p80
      %p83 = scmp.ne.s32.totalorder %s68, %s82
      %p84 = scmp.eq.s32.totalorder %s23, 0
      %p85 = por %p83, %p84
      %s87 = sadd.s32 %s86, 1
      %p90 = scmp.eq.s32.totalorder %s17, 1
      %p91 = scmp.ne.s32.totalorder %s86, %s88
      %p92 = scmp.eq.s32.totalorder %s17, 0
      %p93 = por %p91, %p92
      %p94 = scmp.ne.s32.totalorder %s86, %s88
      %p95 = scmp.eq.s32.totalorder %s22, 1
      %p96 = por %p94, %p95
      %p97 = scmp.ne.s32.totalorder %s88, %s89
      %p98 = scmp.eq.s32.totalorder %s22, 0
      %p99 = por %p97, %p98
      %p100 = scmp.ne.s32.totalorder %s88, %s89
      %p101 = scmp.eq.s32.totalorder %s23, 1
      %p102 = por %p100, %p101
      %p104 = scmp.ne.s32.totalorder %s89, %s103
      %p105 = scmp.eq.s32.totalorder %s23, 0
      %p106 = por %p104, %p105
      %s107 = ssub.s32 %s24, %s36
      %s108 = ssub.s32 %s25, %s32
      %s109 = sor.u32 %s107, %s108
      %p110 = scmp.eq.s32.totalorder %s109, 0
      %s112 = sadd.s32 %s111, 1
      %s113 = scalar_select %p110, %s111, %s112
      %p116 = pneg %p110
      %p117 = scmp.eq.s32.totalorder %s17, 1
      %p118 = por %p116, %p117
      %p119 = scmp.ne.s32.totalorder %s111, %s114
      %p120 = scmp.eq.s32.totalorder %s17, 0
      %p121 = por %p119, %p120
      %p122 = scmp.ne.s32.totalorder %s111, %s114
      %p123 = scmp.eq.s32.totalorder %s22, 1
      %p124 = por %p122, %p123
      %p125 = scmp.ne.s32.totalorder %s114, %s115
      %p126 = scmp.eq.s32.totalorder %s22, 0
      %p127 = por %p125, %p126
      %p128 = scmp.ne.s32.totalorder %s114, %s115
      %p129 = scmp.eq.s32.totalorder %s23, 1
      %p130 = por %p128, %p129
      %p132 = scmp.ne.s32.totalorder %s115, %s131
      %p133 = scmp.eq.s32.totalorder %s23, 0
      %p134 = por %p132, %p133
      %s135 = sadd.s32 %s24, %s25
      %s136 = sadd.s32 %s36, %s32
      %s137 = ssub.s32 %s135, %s136
      %p138 = scmp.eq.s32.totalorder %s137, 0
      %s140 = sadd.s32 %s139, 1
      %s141 = scalar_select %p138, %s139, %s140
      %p144 = pneg %p138
      %p145 = scmp.eq.s32.totalorder %s17, 1
      %p146 = por %p144, %p145
      %p147 = scmp.ne.s32.totalorder %s139, %s142
      %p148 = scmp.eq.s32.totalorder %s17, 0
      %p149 = por %p147, %p148
      %p150 = scmp.ne.s32.totalorder %s139, %s142
      %p151 = scmp.eq.s32.totalorder %s22, 1
      %p152 = por %p150, %p151
      %p153 = scmp.ne.s32.totalorder %s142, %s143
      %p154 = scmp.eq.s32.totalorder %s22, 0
      %p155 = por %p153, %p154
      %p156 = scmp.ne.s32.totalorder %s142, %s143
      %p157 = scmp.eq.s32.totalorder %s23, 1
      %p158 = por %p156, %p157
      %p160 = scmp.ne.s32.totalorder %s143, %s159
      %p161 = scmp.eq.s32.totalorder %s23, 0
      %p162 = por %p160, %p161
      %p163 = scmp.le.s32.totalorder 1, %s17
      %p164 = scmp.lt.s32.totalorder %s17, 3
      %p165 = pnand %p163, %p164
      %p166 = pneg %p165
      // Predicated region
      $region9: #{tpu_custom_call.1} parent=5 // pred_check
        _
      $region10: #{tpu_custom_call.1} parent=5 // pred_check_branch
        %168 = sbr.rel (%p165) target = $region12
      $region11: #{tpu_custom_call.1} parent=5 // pred_region
        %s169 = ssub.s32 %s17, 1
        // Predicated region
        $region13: #{tpu_custom_call.1} parent=11 // pred_check
          %p170 = pneg %p78
        $region14: #{tpu_custom_call.1} parent=11 // pred_check_branch
          %172 = sbr.rel (%p170) target = $region16
        $region15: #{tpu_custom_call.1} parent=11 // pred_region
          _
        $region16: #{tpu_custom_call.1} parent=11 // pred_fallthru
          _
        // Predicated region
        $region17: #{tpu_custom_call.1} parent=11 // pred_check
          %p173 = pneg %p99
        $region18: #{tpu_custom_call.1} parent=11 // pred_check_branch
          %175 = sbr.rel (%p173) target = $region20
        $region19: #{tpu_custom_call.1} parent=11 // pred_region
          _
        $region20: #{tpu_custom_call.1} parent=11 // pred_fallthru
          _
      $region12: #{tpu_custom_call.1} parent=5 // pred_fallthru
        _
      %p176 = scmp.lt.s32.totalorder %s17, 2
      // Predicated region
      $region21: #{tpu_custom_call.1} parent=5 // pred_check
        %p177 = pneg %p176
      $region22: #{tpu_custom_call.1} parent=5 // pred_check_branch
        %179 = sbr.rel (%p177) target = $region24
      $region23: #{tpu_custom_call.1} parent=5 // pred_region
        // Predicated region
        $region25: #{tpu_custom_call.1} parent=23 // pred_check
          %p180 = pneg %p51
        $region26: #{tpu_custom_call.1} parent=23 // pred_check_branch
          %182 = sbr.rel (%p180) target = $region28
        $region27: #{tpu_custom_call.1} parent=23 // pred_region
          %s183 = smul.u32 2, %s25
          %p184 = scmp.lt.s32.totalorder %s24, 1
          %s185 = scalar_select %p184, %s24, 1
          %p186 = scmp.lt.s32.totalorder %s183, 1
          %s187 = scalar_select %p186, %s183, 1
          %s188 = smul.addr %s185, 2
          %s189 = sadd.s32 %s187, %s188
          %s190 = smul.addr %s189, 4
          %s191 = scalar_lea.vmem %s0, %s190
          %s192 = smul.u32 2, %s25
        $region28: #{tpu_custom_call.1} parent=23 // pred_fallthru
          _
      $region24: #{tpu_custom_call.1} parent=5 // pred_fallthru
        _
      %p193 = scmp.le.s32.totalorder 1, %s17
      %p194 = scmp.lt.s32.totalorder %s17, 3
      %p195 = pnand %p193, %p194
      %p196 = pneg %p195
      // Predicated region
      $region29: #{tpu_custom_call.1} parent=5 // pred_check
        _
      $region30: #{tpu_custom_call.1} parent=5 // pred_check_branch
        %198 = sbr.rel (%p195) target = $region32
      $region31: #{tpu_custom_call.1} parent=5 // pred_region
        %s199 = ssub.s32 %s17, 1
        %s200 = smul.u32 2, %s27
        %p201 = scmp.lt.s32.totalorder %s26, 1
        %s202 = scalar_select %p201, %s26, 1
        %p203 = scmp.lt.s32.totalorder %s200, 1
        %s204 = scalar_select %p203, %s200, 1
        %s205 = smul.addr %s202, 2
        %s206 = sadd.s32 %s204, %s205
        %s207 = smul.addr %s206, 4
        %s208 = scalar_lea.vmem %s0, %s207
        %p209 = pneg %p57
        %p210 = pneg %p54
        %p211 = pneg %p78
        %p212 = pneg %p75
        %p213 = pneg %p99
        %p214 = pneg %p96
        %p215 = pneg %p127
        %p216 = pneg %p124
        %s217 = sand.u32 %s114, 1
        %s218 = scalar_lea.sflag [#allocation3], %s217
        %s219 = sand.u32 %s114, 1
        %s220 = smul.addr %s219, 64
        %s221 = scalar_lea.vmem [#allocation2], %s220
        %p222 = pneg %p155
        %p223 = pneg %p152
        %s224 = sand.u32 %s142, 1
        %s225 = scalar_lea.sflag [#allocation5], %s224
        %s226 = sand.u32 %s142, 1
        %s227 = smul.addr %s226, 8
        %s228 = scalar_lea.vmem [#allocation4], %s227
        %s229 = smul.u32 2, %s27
        %p230 = scmp.lt.s32.totalorder %s26, 1
        %s231 = scalar_select %p230, %s26, 1
        %p232 = scmp.lt.s32.totalorder %s229, 1
        %s233 = scalar_select %p232, %s229, 1
        %s234 = smul.addr %s231, 2
        %s235 = sadd.s32 %s233, %s234
        %s236 = smul.addr %s235, 4
        %s237 = scalar_lea.vmem %s0, %s236
        %s238 = smul.u32 2, %s27
        %s239 = smul.u32 2, %s27
        %s240 = sadd.s32 %s26, %s27
        %v241 = vld [vmem:[%s237] sm:$0xff]
        %v242 = vld [vmem:[%s1] sm:$0xff]
        %v243 = vld [vmem:[%s1 + $0x8] sm:$0xff]
        %v244 = vld [vmem:[%s1 + $0x10] sm:$0xff]
        %v245 = vld [vmem:[%s1 + $0x18] sm:$0xff]
        %247 = vset.pattern.permute.xlu0 0
        %248 = vperm.xlu0 %247, %v242
        %v249 = vpop.permute.xlu0 %248
        %252 = vset.pattern.permute.xlu0 0
        %253 = vperm.xlu0 %252, %v243
        %v254 = vpop.permute.xlu0 %253
        %257 = vset.pattern.permute.xlu0 0
        %258 = vperm.xlu0 %257, %v244
        %v259 = vpop.permute.xlu0 %258
        %262 = vset.pattern.permute.xlu0 0
        %263 = vperm.xlu0 %262, %v245
        %v264 = vpop.permute.xlu0 %263
        %v267 = vperm.slane %v241, 0
        %v268 = vperm.slane %v241, 4
        %v271 = vperm.slane %v267, 0
        %v272 = vperm.slane %v268, 0
        %v273 = vmul.f32 %v249, %v271
        %v274 = vmul.f32 %v249, %v272
        %v275 = vmul.f32 %v254, %v271
        %v276 = vmul.f32 %v254, %v272
        %v277 = vmul.f32 %v259, %v271
        %v278 = vmul.f32 %v259, %v272
        %v279 = vmul.f32 %v264, %v271
        %v280 = vmul.f32 %v264, %v272
        %281 = vset.pattern.permute.xlu0 1
        %282 = vperm.xlu0 %281, %v242
        %v283 = vpop.permute.xlu0 %282
        %285 = vset.pattern.permute.xlu0 1
        %286 = vperm.xlu0 %285, %v243
        %v287 = vpop.permute.xlu0 %286
        %289 = vset.pattern.permute.xlu0 1
        %290 = vperm.xlu0 %289, %v244
        %v291 = vpop.permute.xlu0 %290
        %293 = vset.pattern.permute.xlu0 1
        %294 = vperm.xlu0 %293, %v245
        %v295 = vpop.permute.xlu0 %294
        %v297 = vperm.slane %v241, 1
        %v298 = vperm.slane %v241, 5
        %v301 = vperm.slane %v297, 1
        %v302 = vperm.slane %v298, 1
        %v303 = vmul.f32 %v283, %v301
        %v304 = vmul.f32 %v283, %v302
        %v305 = vmul.f32 %v287, %v301
        %v306 = vmul.f32 %v287, %v302
        %v307 = vmul.f32 %v291, %v301
        %v308 = vmul.f32 %v291, %v302
        %v309 = vmul.f32 %v295, %v301
        %v310 = vmul.f32 %v295, %v302
        %v311 = vadd.f32 %v273, %v303
        %v312 = vadd.f32 %v274, %v304
        %v313 = vadd.f32 %v275, %v305
        %v314 = vadd.f32 %v276, %v306
        %v315 = vadd.f32 %v277, %v307
        %v316 = vadd.f32 %v278, %v308
        %v317 = vadd.f32 %v279, %v309
        %v318 = vadd.f32 %v280, %v310
        %319 = vset.pattern.permute.xlu0 2
        %320 = vperm.xlu0 %319, %v242
        %v321 = vpop.permute.xlu0 %320
        %323 = vset.pattern.permute.xlu0 2
        %324 = vperm.xlu0 %323, %v243
        %v325 = vpop.permute.xlu0 %324
        %327 = vset.pattern.permute.xlu0 2
        %328 = vperm.xlu0 %327, %v244
        %v329 = vpop.permute.xlu0 %328
        %331 = vset.pattern.permute.xlu0 2
        %332 = vperm.xlu0 %331, %v245
        %v333 = vpop.permute.xlu0 %332
        %v335 = vperm.slane %v241, 2
        %v336 = vperm.slane %v241, 6
        %v339 = vperm.slane %v335, 2
        %v340 = vperm.slane %v336, 2
        %v341 = vmul.f32 %v321, %v339
        %v342 = vmul.f32 %v321, %v340
        %v343 = vmul.f32 %v325, %v339
        %v344 = vmul.f32 %v325, %v340
        %v345 = vmul.f32 %v329, %v339
        %v346 = vmul.f32 %v329, %v340
        %v347 = vmul.f32 %v333, %v339
        %v348 = vmul.f32 %v333, %v340
        %v349 = vadd.f32 %v311, %v341
        %v350 = vadd.f32 %v312, %v342
        %v351 = vadd.f32 %v313, %v343
        %v352 = vadd.f32 %v314, %v344
        %v353 = vadd.f32 %v315, %v345
        %v354 = vadd.f32 %v316, %v346
        %v355 = vadd.f32 %v317, %v347
        %v356 = vadd.f32 %v318, %v348
        %357 = vset.pattern.permute.xlu0 3
        %358 = vperm.xlu0 %357, %v242
        %v359 = vpop.permute.xlu0 %358
        %361 = vset.pattern.permute.xlu0 3
        %362 = vperm.xlu0 %361, %v243
        %v363 = vpop.permute.xlu0 %362
        %365 = vset.pattern.permute.xlu0 3
        %366 = vperm.xlu0 %365, %v244
        %v367 = vpop.permute.xlu0 %366
        %369 = vset.pattern.permute.xlu0 3
        %370 = vperm.xlu0 %369, %v245
        %v371 = vpop.permute.xlu0 %370
        %v373 = vperm.slane %v241, 3
        %v374 = vperm.slane %v241, 7
        %v377 = vperm.slane %v373, 3
        %v378 = vperm.slane %v374, 3
        %v379 = vmul.f32 %v359, %v377
        %v380 = vmul.f32 %v359, %v378
        %v381 = vmul.f32 %v363, %v377
        %v382 = vmul.f32 %v363, %v378
        %v383 = vmul.f32 %v367, %v377
        %v384 = vmul.f32 %v367, %v378
        %v385 = vmul.f32 %v371, %v377
        %v386 = vmul.f32 %v371, %v378
        %v387 = vadd.f32 %v349, %v379
        %v388 = vadd.f32 %v350, %v380
        %v389 = vadd.f32 %v351, %v381
        %v390 = vadd.f32 %v352, %v382
        %v391 = vadd.f32 %v353, %v383
        %v392 = vadd.f32 %v354, %v384
        %v393 = vadd.f32 %v355, %v385
        %v394 = vadd.f32 %v356, %v386
        %v395 = vld [vmem:[%s2] sm:$0xff]
        %v396 = vld [vmem:[%s2 + $0x8] sm:$0xff]
        %v397 = vld [vmem:[%s2 + $0x10] sm:$0xff]
        %v398 = vld [vmem:[%s2 + $0x18] sm:$0xff]
        %400 = vset.pattern.permute.xlu0 0
        %401 = vperm.xlu0 %400, %v395
        %v402 = vpop.permute.xlu0 %401
        %405 = vset.pattern.permute.xlu0 0
        %406 = vperm.xlu0 %405, %v396
        %v407 = vpop.permute.xlu0 %406
        %410 = vset.pattern.permute.xlu0 0
        %411 = vperm.xlu0 %410, %v397
        %v412 = vpop.permute.xlu0 %411
        %415 = vset.pattern.permute.xlu0 0
        %416 = vperm.xlu0 %415, %v398
        %v417 = vpop.permute.xlu0 %416
        %v419 = vadd.f32 %v387, %v402
        %v420 = vadd.f32 %v388, %v402
        %v421 = vadd.f32 %v389, %v407
        %v422 = vadd.f32 %v390, %v407
        %v423 = vadd.f32 %v391, %v412
        %v424 = vadd.f32 %v392, %v412
        %v425 = vadd.f32 %v393, %v417
        %v426 = vadd.f32 %v394, %v417
        %v427 = vxor.u32 %v419, 2147483648
        %v428 = vxor.u32 %v420, 2147483648
        %v429 = vxor.u32 %v421, 2147483648
        %v430 = vxor.u32 %v422, 2147483648
        %v431 = vxor.u32 %v423, 2147483648
        %v432 = vxor.u32 %v424, 2147483648
        %v433 = vxor.u32 %v425, 2147483648
        %v434 = vxor.u32 %v426, 2147483648
        %v435 = vmul.f32 %v427, 1.442695
        %v436 = vpow.pop %v435
        %v437 = vmul.f32 %v428, 1.442695
        %v438 = vpow.pop %v437
        %v439 = vmul.f32 %v429, 1.442695
        %v440 = vpow.pop %v439
        %v441 = vmul.f32 %v430, 1.442695
        %v442 = vpow.pop %v441
        %v443 = vmul.f32 %v431, 1.442695
        %v444 = vpow.pop %v443
        %v445 = vmul.f32 %v432, 1.442695
        %v446 = vpow.pop %v445
        %v447 = vmul.f32 %v433, 1.442695
        %v448 = vpow.pop %v447
        %v449 = vmul.f32 %v434, 1.442695
        %v450 = vpow.pop %v449
        %v451 = vadd.f32 %v436, 1.0
        %v452 = vadd.f32 %v438, 1.0
        %v453 = vadd.f32 %v440, 1.0
        %v454 = vadd.f32 %v442, 1.0
        %v455 = vadd.f32 %v444, 1.0
        %v456 = vadd.f32 %v446, 1.0
        %v457 = vadd.f32 %v448, 1.0
        %v458 = vadd.f32 %v450, 1.0
        %v459 = vrcp.pop %v451
        %v460 = vmul.f32 %v451, %v459
        %v461 = vsub.f32 1.0, %v460
        %v462 = vmul.f32 %v459, %v461
        %v463 = vadd.f32 %v459, %v462
        %vm464 = vweird.f32 %v451
        %vm465 = vweird.f32 %v459
        %vm466 = vmor %vm464, %vm465
        %v467 = vsel %vm466, %v459, %v463
        %v468 = vand.u32 2147483647, %v451
        %vm469 = vcmp.eq.f32.partialorder %v468, 8.507059e+37
        %v470 = vand.u32 %v451, 2147483648
        %v471 = vor.u32 1.1754944e-38, %v470
        %v472 = vsel %vm469, %v471, %v467
        %v473 = vmul.f32 1.0, %v472
        %v474 = vrcp.pop %v452
        %v475 = vmul.f32 %v452, %v474
        %v476 = vsub.f32 1.0, %v475
        %v477 = vmul.f32 %v474, %v476
        %v478 = vadd.f32 %v474, %v477
        %vm479 = vweird.f32 %v452
        %vm480 = vweird.f32 %v474
        %vm481 = vmor %vm479, %vm480
        %v482 = vsel %vm481, %v474, %v478
        %v483 = vand.u32 2147483647, %v452
        %vm484 = vcmp.eq.f32.partialorder %v483, 8.507059e+37
        %v485 = vand.u32 %v452, 2147483648
        %v486 = vor.u32 1.1754944e-38, %v485
        %v487 = vsel %vm484, %v486, %v482
        %v488 = vmul.f32 1.0, %v487
        %v489 = vrcp.pop %v453
        %v490 = vmul.f32 %v453, %v489
        %v491 = vsub.f32 1.0, %v490
        %v492 = vmul.f32 %v489, %v491
        %v493 = vadd.f32 %v489, %v492
        %vm494 = vweird.f32 %v453
        %vm495 = vweird.f32 %v489
        %vm496 = vmor %vm494, %vm495
        %v497 = vsel %vm496, %v489, %v493
        %v498 = vand.u32 2147483647, %v453
        %vm499 = vcmp.eq.f32.partialorder %v498, 8.507059e+37
        %v500 = vand.u32 %v453, 2147483648
        %v501 = vor.u32 1.1754944e-38, %v500
        %v502 = vsel %vm499, %v501, %v497
        %v503 = vmul.f32 1.0, %v502
        %v504 = vrcp.pop %v454
        %v505 = vmul.f32 %v454, %v504
        %v506 = vsub.f32 1.0, %v505
        %v507 = vmul.f32 %v504, %v506
        %v508 = vadd.f32 %v504, %v507
        %vm509 = vweird.f32 %v454
        %vm510 = vweird.f32 %v504
        %vm511 = vmor %vm509, %vm510
        %v512 = vsel %vm511, %v504, %v508
        %v513 = vand.u32 2147483647, %v454
        %vm514 = vcmp.eq.f32.partialorder %v513, 8.507059e+37
        %v515 = vand.u32 %v454, 2147483648
        %v516 = vor.u32 1.1754944e-38, %v515
        %v517 = vsel %vm514, %v516, %v512
        %v518 = vmul.f32 1.0, %v517
        %v519 = vrcp.pop %v455
        %v520 = vmul.f32 %v455, %v519
        %v521 = vsub.f32 1.0, %v520
        %v522 = vmul.f32 %v519, %v521
        %v523 = vadd.f32 %v519, %v522
        %vm524 = vweird.f32 %v455
        %vm525 = vweird.f32 %v519
        %vm526 = vmor %vm524, %vm525
        %v527 = vsel %vm526, %v519, %v523
        %v528 = vand.u32 2147483647, %v455
        %vm529 = vcmp.eq.f32.partialorder %v528, 8.507059e+37
        %v530 = vand.u32 %v455, 2147483648
        %v531 = vor.u32 1.1754944e-38, %v530
        %v532 = vsel %vm529, %v531, %v527
        %v533 = vmul.f32 1.0, %v532
        %v534 = vrcp.pop %v456
        %v535 = vmul.f32 %v456, %v534
        %v536 = vsub.f32 1.0, %v535
        %v537 = vmul.f32 %v534, %v536
        %v538 = vadd.f32 %v534, %v537
        %vm539 = vweird.f32 %v456
        %vm540 = vweird.f32 %v534
        %vm541 = vmor %vm539, %vm540
        %v542 = vsel %vm541, %v534, %v538
        %v543 = vand.u32 2147483647, %v456
        %vm544 = vcmp.eq.f32.partialorder %v543, 8.507059e+37
        %v545 = vand.u32 %v456, 2147483648
        %v546 = vor.u32 1.1754944e-38, %v545
        %v547 = vsel %vm544, %v546, %v542
        %v548 = vmul.f32 1.0, %v547
        %v549 = vrcp.pop %v457
        %v550 = vmul.f32 %v457, %v549
        %v551 = vsub.f32 1.0, %v550
        %v552 = vmul.f32 %v549, %v551
        %v553 = vadd.f32 %v549, %v552
        %vm554 = vweird.f32 %v457
        %vm555 = vweird.f32 %v549
        %vm556 = vmor %vm554, %vm555
        %v557 = vsel %vm556, %v549, %v553
        %v558 = vand.u32 2147483647, %v457
        %vm559 = vcmp.eq.f32.partialorder %v558, 8.507059e+37
        %v560 = vand.u32 %v457, 2147483648
        %v561 = vor.u32 1.1754944e-38, %v560
        %v562 = vsel %vm559, %v561, %v557
        %v563 = vmul.f32 1.0, %v562
        %v564 = vrcp.pop %v458
        %v565 = vmul.f32 %v458, %v564
        %v566 = vsub.f32 1.0, %v565
        %v567 = vmul.f32 %v564, %v566
        %v568 = vadd.f32 %v564, %v567
        %vm569 = vweird.f32 %v458
        %vm570 = vweird.f32 %v564
        %vm571 = vmor %vm569, %vm570
        %v572 = vsel %vm571, %v564, %v568
        %v573 = vand.u32 2147483647, %v458
        %vm574 = vcmp.eq.f32.partialorder %v573, 8.507059e+37
        %v575 = vand.u32 %v458, 2147483648
        %v576 = vor.u32 1.1754944e-38, %v575
        %v577 = vsel %vm574, %v576, %v572
        %v578 = vmul.f32 1.0, %v577
        %v579 = vmul.f32 %v419, %v473
        %v580 = vmul.f32 %v420, %v488
        %v581 = vmul.f32 %v421, %v503
        %v582 = vmul.f32 %v422, %v518
        %v583 = vmul.f32 %v423, %v533
        %v584 = vmul.f32 %v424, %v548
        %v585 = vmul.f32 %v425, %v563
        %v586 = vmul.f32 %v426, %v578
        %587 = vst [vmem:[%s221] sm:$0xff] %v579
        %588 = vst [vmem:[%s221 + $0x8] sm:$0xff] %v580
        %589 = vst [vmem:[%s221 + $0x10] sm:$0xff] %v581
        %590 = vst [vmem:[%s221 + $0x18] sm:$0xff] %v582
        %591 = vst [vmem:[%s221 + $0x20] sm:$0xff] %v583
        %592 = vst [vmem:[%s221 + $0x28] sm:$0xff] %v584
        %593 = vst [vmem:[%s221 + $0x30] sm:$0xff] %v585
        %594 = vst [vmem:[%s221 + $0x38] sm:$0xff] %v586
        %v595 = vadd.f32 %v579, %v580
        %v596 = vadd.f32 %v595, %v581
        %v597 = vadd.f32 %v596, %v582
        %v598 = vadd.f32 %v597, %v583
        %v599 = vadd.f32 %v598, %v584
        %v600 = vadd.f32 %v599, %v585
        %v601 = vadd.f32 %v600, %v586
        %602 = vadd.xlane.f32.xlu0 %v601
        %v603 = vpop.xlane.xlu0 %602
        %v604 = vrot.slane %v603, 4
        %v605 = vadd.f32 %v603, %v604
        %v606 = vrot.slane %v605, 2
        %v607 = vadd.f32 %v605, %v606
        %v608 = vrot.slane %v607, 1
        %v609 = vadd.f32 %v607, %v608
        %s610 = vtos %v609
        %v611 = vstv %s610
        %v612 = vmul.f32 %v611, 0.0009765625
        %613 = vst [vmem:[%s228] sm:$0xff] %v612
        %s614 = sand.u32 %s114, 1
        %s615 = scalar_lea.sflag [#allocation3], %s614
        %s616 = sand.u32 %s114, 1
        %s617 = smul.addr %s616, 64
        %s618 = scalar_lea.vmem [#allocation2], %s617
        %s619 = sand.u32 %s142, 1
        %s620 = scalar_lea.sflag [#allocation5], %s619
        %s621 = sand.u32 %s142, 1
        %s622 = smul.addr %s621, 8
        %s623 = scalar_lea.vmem [#allocation4], %s622
        // Predicated region
        $region33: #{tpu_custom_call.1} parent=31 // pred_check
          %p624 = pneg %p124
        $region34: #{tpu_custom_call.1} parent=31 // pred_check_branch
          %626 = sbr.rel (%p624) target = $region36
        $region35: #{tpu_custom_call.1} parent=31 // pred_region
          %s627 = smul.u32 2, %s27
          %629 = vsyncadd %s615, 0
          %s630 = smul.addr %s26, 8
          %s631 = sadd.s32 %s627, %s630
          %s632 = smul.addr %s631, 8
          %s633 = scalar_lea.hbm %s3, %s632
          %s634 = sshll.u32 %s618, 4
          %s635 = int_to_ptr.vmem [resolvable:$true] %s634
          %s636 = sshll.u32 %s633, 4
          %s637 = int_to_ptr.hbm [resolvable:$true] %s636
          %642 = dma.vmem_to_hbm [thread:$0]  %s635, 1024, %s637, %s615, 256, 256, 16
        $region36: #{tpu_custom_call.1} parent=31 // pred_fallthru
          _
        // Predicated region
        $region37: #{tpu_custom_call.1} parent=31 // pred_check
          %p643 = pneg %p152
        $region38: #{tpu_custom_call.1} parent=31 // pred_check_branch
          %645 = sbr.rel (%p643) target = $region40
        $region39: #{tpu_custom_call.1} parent=31 // pred_region
          %s646 = sadd.s32 %s26, %s27
          %648 = vsyncadd %s620, 0
          %s649 = smul.addr %s646, 8
          %s650 = scalar_lea.hbm %s4, %s649
          %s652 = sshll.u32 %s623, 4
          %s653 = int_to_ptr.vmem [resolvable:$true] %s652
          %s654 = sshll.u32 %s650, 4
          %s655 = int_to_ptr.hbm [resolvable:$true] %s654
          %657 = dma.vmem_to_hbm [thread:$0]  %s653, 128, %s655, %s620
        $region40: #{tpu_custom_call.1} parent=31 // pred_fallthru
          _
      $region32: #{tpu_custom_call.1} parent=5 // pred_fallthru
        _
      %p658 = scmp.le.s32.totalorder 2, %s17
      // Predicated region
      $region41: #{tpu_custom_call.1} parent=5 // pred_check
        %p659 = pneg %p658
      $region42: #{tpu_custom_call.1} parent=5 // pred_check_branch
        %661 = sbr.rel (%p659) target = $region44
      $region43: #{tpu_custom_call.1} parent=5 // pred_region
        %s662 = ssub.s32 %s17, 2
        // Predicated region
        $region45: #{tpu_custom_call.1} parent=43 // pred_check
          %p663 = pneg %p130
        $region46: #{tpu_custom_call.1} parent=43 // pred_check_branch
          %665 = sbr.rel (%p663) target = $region48
        $region47: #{tpu_custom_call.1} parent=43 // pred_region
          %s666 = sand.u32 %s115, 1
          %s667 = scalar_lea.sflag [#allocation3], %s666
          %s668 = sand.u32 %s115, 1
          %s669 = smul.addr %s668, 64
          %s670 = scalar_lea.vmem [#allocation2], %s669
          %672 = dma.done %s667, 1024
        $region48: #{tpu_custom_call.1} parent=43 // pred_fallthru
          _
        // Predicated region
        $region49: #{tpu_custom_call.1} parent=43 // pred_check
          %p673 = pneg %p158
        $region50: #{tpu_custom_call.1} parent=43 // pred_check_branch
          %675 = sbr.rel (%p673) target = $region52
        $region51: #{tpu_custom_call.1} parent=43 // pred_region
          %s676 = sand.u32 %s143, 1
          %s677 = scalar_lea.sflag [#allocation5], %s676
          %s678 = sand.u32 %s143, 1
          %s679 = smul.addr %s678, 8
          %s680 = scalar_lea.vmem [#allocation4], %s679
          %682 = dma.done %s677, 128
        $region52: #{tpu_custom_call.1} parent=43 // pred_fallthru
          _
      $region44: #{tpu_custom_call.1} parent=5 // pred_fallthru
        _
    $region6: #{tpu_custom_call.1} parent=1 // loop_footer
      %s21 = sadd.s32 1, %s17
    $region7: #{tpu_custom_call.1} parent=1 // loop_footer_branch
      %16 = sbr.rel target = $region3
    $region8: #{tpu_custom_call.1} parent=1 // loop_exit
      _
    %683 = vsyncpa [#allocation3], 1
    %s684 = scalar_lea.sflag [#allocation3], 1
    %685 = vsyncpa %s684, 1
    %686 = vsyncpa [#allocation5], 1
    %s687 = scalar_lea.sflag [#allocation5], 1
    %688 = vsyncpa %s687, 1

</llo_original>
